<compile_context>
chip_gen: v5e
topology: v5e:2x2
jax: 0.10.0
libtpu: 0.0.40
codegen_flags: <defaults>
</compile_context>

<pallas_src>
import math

import jax
import jax.numpy as jnp
from jax.experimental import pallas as pl
from jax.experimental.pallas import tpu as pltpu


# ----------------------------------------------------------------------------
# helpers
# ----------------------------------------------------------------------------
def _cp():
    return pltpu.CompilerParams(
        dimension_semantics=("arbitrary",),
        vmem_limit_bytes=48 * 1024 * 1024)


def _full_spec(shape):
    # whole-array block (grid has a single step)
    return pl.BlockSpec(shape, lambda i: (0,) * len(shape))


def _erf(x):
    # Abramowitz & Stegun 7.1.26, |err| < 1.5e-7 (matches torch's exact GELU
    # to f32 precision).
    a1, a2, a3, a4, a5 = (0.254829592, -0.284496736, 1.421413741,
                          -1.453152027, 1.061405429)
    p = 0.3275911
    ax = jnp.abs(x)
    t = 1.0 / (1.0 + p * ax)
    poly = ((((a5 * t + a4) * t + a3) * t + a2) * t + a1) * t
    y = 1.0 - poly * jnp.exp(-ax * ax)
    return jnp.where(x >= 0, y, -y)


# ----------------------------------------------------------------------------
# fused embedding + masking-score kernel
# ----------------------------------------------------------------------------
def _make_embed_score_kernel(batch, seq_len, seq_size, d_model):
    B, T, D = batch, seq_len, d_model
    fold = (T % 8 == 0)   # sublane-tile aligned -> fold B into the MXU M dim

    def kernel(x_ref, w_ref, pe_ref, ex_ref, score_ref):
        pe = pe_ref[...]                                        # (T, D) f32
        y_all = None
        if fold:
            # circular conv as ONE (B*T, C) x (C, 3D) matmul, bf16 operands,
            # f32 accumulate on the MXU.
            x2 = x_ref[...].reshape(B * T, x_ref.shape[-1]).astype(jnp.bfloat16)
            y_all = jnp.dot(x2, w_ref[...], preferred_element_type=jnp.float32)
        for b in range(B):
            if fold:
                yb = y_all[b * T:(b + 1) * T]                   # (T, 3D)
            else:
                yb = jnp.dot(x_ref[b].astype(jnp.bfloat16), w_ref[...],
                             preferred_element_type=jnp.float32)
            y_prev = yb[:, :D]          # tap k=0 -> contributes x[t-1]
            y_cur = yb[:, D:2 * D]      # tap k=1 -> x[t]
            y_next = yb[:, 2 * D:]      # tap k=2 -> x[t+1]
            # circular time shift on the XLU, then positional embedding
            ex = (pltpu.roll(y_prev, 1, 0) + y_cur
                  + pltpu.roll(y_next, T - 1, 0) + pe)          # (T, D)
            ex_ref[b] = ex

            # sliding-window mean / variance score: one (T, D) roll per lag;
            # the variance numerator is D-reduced per lag (no second (T, D)
            # accumulator / roll stream).
            row = jax.lax.broadcasted_iota(jnp.int32, (T, D), 0)
            rowc = row[:, :1]                                   # (T, 1)
            w1 = ex
            w2c = jnp.sum(ex * ex, axis=-1, keepdims=True)      # (T, 1)
            for k in range(1, seq_size):
                exk = pltpu.roll(ex, k, 0)
                w1 = w1 + jnp.where(row >= k, exk, 0.0)
                w2c = w2c + jnp.where(
                    rowc >= k,
                    jnp.sum(exk * exk, axis=-1, keepdims=True), 0.0)
            denom = jnp.minimum(rowc.astype(jnp.float32) + 1.0,
                                jnp.float32(seq_size))          # (T, 1)
            mean = w1 / denom                                   # (T, D)
            mean_sum = jnp.sum(mean, axis=-1, keepdims=True)    # (T, 1)
            var_sum = (w2c / denom
                       - jnp.sum(mean * mean, axis=-1, keepdims=True))
            score_ref[b] = var_sum / mean_sum                   # (T, 1)

    return kernel


def embed_and_score(x, w_taps, pe_t, seq_size):
    """DataEmbedding (circular conv + PE) fused with the masking score."""
    B, T, C = x.shape
    D = pe_t.shape[-1]
    kernel = _make_embed_score_kernel(B, T, seq_size, D)
    ex, score = pl.pallas_call(
        kernel,
        out_shape=(jax.ShapeDtypeStruct((B, T, D), jnp.float32),
                   jax.ShapeDtypeStruct((B, T, 1), jnp.float32)),
        grid=(1,),
        in_specs=[_full_spec((B, T, C)),
                  _full_spec((C, 3 * D)),
                  _full_spec((T, D))],
        out_specs=(_full_spec((B, T, D)),
                   _full_spec((B, T, 1))),
        compiler_params=_cp(),
    )(x, w_taps, pe_t)
    # TODO(synk): at scale emit the score lane-dense as (B, T) to avoid the
    # masked narrow store.
    return ex, score[..., 0]


# ----------------------------------------------------------------------------
# fused attention stack kernel (all layers + final LayerNorm [+ proj head])
# ----------------------------------------------------------------------------
def _make_stack_kernel(batch, seq_len, n_layers, d_model, emit_attn, with_pro):
    B, T, L, D = batch, seq_len, n_layers, d_model
    inv_sqrt_d = 1.0 / math.sqrt(D)
    fold = (T % 8 == 0)   # sublane-tile aligned -> fold B into the MXU M dim

    def proj(x3, w):
        """(B, T, K) f32 @ (K, N) bf16 -> (B, T, N) f32 (f32 MXU accumulate)."""
        if fold:
            kdim = x3.shape[-1]
            y = jnp.dot(x3.reshape(B * T, kdim).astype(jnp.bfloat16), w,
                        preferred_element_type=jnp.float32)
            return y.reshape(B, T, w.shape[-1])
        # T not a multiple of the sublane tile (e.g. encoder on T-tr tokens):
        # per-batch 2D matmuls avoid an unaligned in-kernel reshape.
        return jnp.stack([
            jnp.dot(x3[i].astype(jnp.bfloat16), w,
                    preferred_element_type=jnp.float32) for i in range(B)])

    def kernel(*refs):
        it = iter(refs)
        x_ref = next(it)
        wqkv_ref = next(it)
        bqkv_ref = next(it)
        wo_ref = next(it)
        bo_ref = next(it)
        g_ref = next(it)
        be_ref = next(it)
        fg_ref = next(it)
        fb_ref = next(it)
        if with_pro:
            w1_ref = next(it)
            b1_ref = next(it)
            w2_ref = next(it)
            b2_ref = next(it)
        y_ref = next(it)
        attn_ref = next(it) if emit_attn else None

        x = x_ref[...]                                          # (B, T, D) f32
        for l in range(L):
            # fused Q/K/V projection, batch folded into M
            qkv = proj(x, wqkv_ref[l]) + bqkv_ref[l]            # (B, T, 3D)
            q = qkv[..., :D].astype(jnp.bfloat16)
            k = qkv[..., D:2 * D].astype(jnp.bfloat16)
            v = qkv[..., 2 * D:].astype(jnp.bfloat16)
            # contraction on trailing dims: no explicit k.T materialization
            s = jnp.einsum('bqd,bkd->bqk', q, k,
                           preferred_element_type=jnp.float32) * inv_sqrt_d
            s = s - jnp.max(s, axis=-1, keepdims=True)
            p = jnp.exp(s)
            attn = p / jnp.sum(p, axis=-1, keepdims=True)       # exact softmax
            if emit_attn:
                attn_ref[l] = attn                              # (B, T, T)
            out = jnp.einsum('bqk,bkd->bqd', attn.astype(jnp.bfloat16), v,
                             preferred_element_type=jnp.float32) + x
            # LayerNorm(d_model), eps=1e-5 (torch default)
            mu = jnp.mean(out, axis=-1, keepdims=True)
            var = jnp.mean((out - mu) ** 2, axis=-1, keepdims=True)
            normed = ((out - mu) * jax.lax.rsqrt(var + 1e-5) * g_ref[l]
                      + be_ref[l])
            # reference ordering: out_projection(norm(out)) + out
            x = proj(normed, wo_ref[l]) + bo_ref[l] + out

        # Encoder/Decoder trailing LayerNorm
        mu = jnp.mean(x, axis=-1, keepdims=True)
        var = jnp.mean((x - mu) ** 2, axis=-1, keepdims=True)
        x = (x - mu) * jax.lax.rsqrt(var + 1e-5) * fg_ref[...] + fb_ref[...]

        if with_pro:
            # Linear -> GELU(exact/erf) -> Linear -> Sigmoid
            h = proj(x, w1_ref[...]) + b1_ref[...]
            h = 0.5 * h * (1.0 + _erf(h * (1.0 / math.sqrt(2.0))))
            o = proj(h, w2_ref[...]) + b2_ref[...]
            x = jax.nn.sigmoid(o)

        y_ref[...] = x

    return kernel


def encoder_stack(x, p):
    """All encoder layers + final LayerNorm in one kernel; attn maps dropped."""
    B, T, D = x.shape
    L = p["wqkv"].shape[0]
    kernel = _make_stack_kernel(B, T, L, D, emit_attn=False, with_pro=False)
    return pl.pallas_call(
        kernel,
        out_shape=jax.ShapeDtypeStruct((B, T, D), jnp.float32),
        grid=(1,),
        in_specs=[_full_spec((B, T, D)),
                  _full_spec((L, D, 3 * D)), _full_spec((L, 1, 3 * D)),
                  _full_spec((L, D, D)), _full_spec((L, 1, D)),
                  _full_spec((L, 1, D)), _full_spec((L, 1, D)),
                  _full_spec((1, D)), _full_spec((1, D))],
        out_specs=_full_spec((B, T, D)),
        compiler_params=_cp(),
    )(x, p["wqkv"], p["bqkv"], p["wo"], p["bo"], p["gamma"], p["beta"],
      p["fgamma"], p["fbeta"])


def decoder_stack(x, p, pro):
    """Decoder layers (attn maps kept) + LayerNorm + projection head, fused."""
    B, T, D = x.shape
    L = p["wqkv"].shape[0]
    kernel = _make_stack_kernel(B, T, L, D, emit_attn=True, with_pro=True)
    rec, attn = pl.pallas_call(
        kernel,
        out_shape=(jax.ShapeDtypeStruct((B, T, D), jnp.float32),
                   jax.ShapeDtypeStruct((L, B, T, T), jnp.float32)),
        grid=(1,),
        in_specs=[_full_spec((B, T, D)),
                  _full_spec((L, D, 3 * D)), _full_spec((L, 1, 3 * D)),
                  _full_spec((L, D, D)), _full_spec((L, 1, D)),
                  _full_spec((L, 1, D)), _full_spec((L, 1, D)),
                  _full_spec((1, D)), _full_spec((1, D)),
                  _full_spec((D, D)), _full_spec((1, D)),
                  _full_spec((D, D)), _full_spec((1, D))],
        out_specs=(_full_spec((B, T, D)),
                   _full_spec((L, B, T, T))),
        compiler_params=_cp(),
    )(x, p["wqkv"], p["bqkv"], p["wo"], p["bo"], p["gamma"], p["beta"],
      p["fgamma"], p["fbeta"],
      pro["w1"], pro["b1"], pro["w2"], pro["b2"])
    return rec, attn


# ----------------------------------------------------------------------------
# parameter construction (deterministic, synthetic)
# ----------------------------------------------------------------------------
def make_positional_embedding(d_model, max_len=128):
    pos = jnp.arange(max_len, dtype=jnp.float32)[:, None]
    div = jnp.exp(jnp.arange(0, d_model, 2, dtype=jnp.float32)
                  * -(math.log(10000.0) / d_model))
    pe = jnp.zeros((max_len, d_model), jnp.float32)
    pe = pe.at[:, 0::2].set(jnp.sin(pos * div))
    pe = pe.at[:, 1::2].set(jnp.cos(pos * div))
    return pe


def make_stack_params(key, d_model, n_layers):
    wqkv, bqkv, wo, bo = [], [], [], []
    for lk in jax.random.split(key, n_layers):
        kk = jax.random.split(lk, 8)

        def lin(kw, kb):
            return (jax.random.normal(kw, (d_model, d_model), jnp.float32) * 0.1,
                    jax.random.normal(kb, (1, d_model), jnp.float32) * 0.01)

        wq, bq = lin(kk[0], kk[1])
        wk, bk = lin(kk[2], kk[3])
        wv, bv = lin(kk[4], kk[5])
        wo_l, bo_l = lin(kk[6], kk[7])
        wqkv.append(jnp.concatenate([wq, wk, wv], axis=1))      # fused (D, 3D)
        bqkv.append(jnp.concatenate([bq, bk, bv], axis=1))      # (1, 3D)
        wo.append(wo_l)
        bo.append(bo_l)
    # matmul weights stored bf16 (MXU-native operands, half the DMA bytes)
    return dict(wqkv=jnp.stack(wqkv).astype(jnp.bfloat16),
                bqkv=jnp.stack(bqkv),
                wo=jnp.stack(wo).astype(jnp.bfloat16),
                bo=jnp.stack(bo),
                gamma=jnp.ones((n_layers, 1, d_model), jnp.float32),
                beta=jnp.zeros((n_layers, 1, d_model), jnp.float32),
                fgamma=jnp.ones((1, d_model), jnp.float32),
                fbeta=jnp.zeros((1, d_model), jnp.float32))


def init_params(key, c_in, d_model, e_layers, max_len=128):
    k_conv, k_enc, k_dec, k_pro = jax.random.split(key, 4)
    # Conv1d weight (d_model, c_in, 3), kaiming-ish scale, no bias.
    w_conv = jax.random.normal(k_conv, (d_model, c_in, 3), jnp.float32) \
        * math.sqrt(2.0 / (c_in * 3))
    # per-tap (c_in, d_model) slabs concatenated along outputs -> (c_in, 3*d_model)
    w_taps = jnp.concatenate([w_conv[:, :, k].T for k in range(3)], axis=1)
    kp = jax.random.split(k_pro, 4)
    pro = dict(
        w1=(jax.random.normal(kp[0], (d_model, d_model), jnp.float32) * 0.1
            ).astype(jnp.bfloat16),
        b1=jax.random.normal(kp[1], (1, d_model), jnp.float32) * 0.01,
        w2=(jax.random.normal(kp[2], (d_model, d_model), jnp.float32) * 0.1
            ).astype(jnp.bfloat16),
        b2=jax.random.normal(kp[3], (1, d_model), jnp.float32) * 0.01)
    return dict(w_taps=w_taps.astype(jnp.bfloat16),
                pe=make_positional_embedding(d_model, max_len),
                enc=make_stack_params(k_enc, d_model, e_layers),
                dec=make_stack_params(k_dec, d_model, e_layers),
                pro=pro,
                mask_token=jnp.zeros((1, 1, d_model), jnp.float32))


# ----------------------------------------------------------------------------
# TemEnc forward
# ----------------------------------------------------------------------------
def tem_enc_forward(x, params, *, seq_size, tr):
    B, T, C = x.shape
    # DataEmbedding + masking score, one fused kernel.
    # Dropout(p=0.05) treated as identity (eval mode).
    ex, score = embed_and_score(x, params["w_taps"], params["pe"][:T], seq_size)

    # top-k mask selection + gather/scatter kept in plain XLA (data-dependent).
    # TODO(synk): fold these gathers/scatters into the stacks via
    # PrefetchScalarGridSpec row-index maps at scale.
    _, masked_idx = jax.lax.top_k(score, tr)                    # (B, tr)
    _, unmasked_idx = jax.lax.top_k(-score, T - tr)             # (B, T - tr)
    bidx = jnp.arange(B)[:, None]

    unmasked_tokens = ex[bidx, unmasked_idx]                    # (B, T-tr, D)
    ux = encoder_stack(unmasked_tokens, params["enc"])          # no attn output

    masked_tokens = params["mask_token"] + params["pe"][masked_idx]

    tokens = jnp.zeros_like(ex)
    tokens = tokens.at[bidx, unmasked_idx].set(ux)
    tokens = tokens.at[bidx, masked_idx].set(masked_tokens)

    rec, attn_all = decoder_stack(tokens, params["dec"], params["pro"])
    return [attn_all[l] for l in range(attn_all.shape[0])] + [rec]


if __name__ == "__main__":
    B, T, c_in, d_model, e_layers, seq_size = 2, 16, 4, 32, 2, 4
    tr_ratio = 0.25
    tr = int(tr_ratio * T)                                      # win_size = T

    key = jax.random.PRNGKey(0)
    kx, kp = jax.random.split(key)
    x = jax.random.normal(kx, (B, T, c_in), jnp.float32)        # (batch, time, channels)
    params = init_params(kp, c_in, d_model, e_layers)

    outs = tem_enc_forward(x, params, seq_size=seq_size, tr=tr)
    outs = jax.block_until_ready(outs)

    # e_layers decoder attention maps (B,T,T) + reconstruction (B,T,D)
    assert len(outs) == e_layers + 1
    assert outs[0].shape == (B, T, T) and outs[-1].shape == (B, T, d_model)
    assert all(bool(jnp.all(jnp.isfinite(o))) for o in outs)
    print("KERNEL_OK")
</pallas_src>

<mosaic_0001>
module attributes {stable_mosaic.version = 11 : i64} {
  func.func @kernel(%arg0: i32, %arg1: memref<2x16x4xf32, #tpu.memory_space<vmem>>, %arg2: memref<4x96xbf16, #tpu.memory_space<vmem>>, %arg3: memref<16x32xf32, #tpu.memory_space<vmem>>, %arg4: memref<2x16x32xf32, #tpu.memory_space<vmem>>, %arg5: memref<2x16x1xf32, #tpu.memory_space<vmem>>) attributes {dimension_semantics = [#tpu.dimension_semantics<arbitrary>], iteration_bounds = array<i64: 1>, scalar_prefetch = 0 : i64, scratch_operands = 0 : i64, tpu.core_type = #tpu.core_type<tc>, window_params = [{pipeline_mode = #tpu.pipeline_mode<synchronous>, transform_indices = @transform_0, window_bounds = array<i64: 2, 16, 4>}, {pipeline_mode = #tpu.pipeline_mode<synchronous>, transform_indices = @transform_1, window_bounds = array<i64: 4, 96>}, {pipeline_mode = #tpu.pipeline_mode<synchronous>, transform_indices = @transform_2, window_bounds = array<i64: 16, 32>}, {pipeline_mode = #tpu.pipeline_mode<synchronous>, transform_indices = @transform_3, window_bounds = array<i64: 2, 16, 32>}, {pipeline_mode = #tpu.pipeline_mode<synchronous>, transform_indices = @transform_4, window_bounds = array<i64: 2, 16, 1>}]} {
    %c0 = arith.constant 0 : index
    %c0_0 = arith.constant 0 : index
    %0 = vector.load %arg3[%c0, %c0_0] : memref<16x32xf32, #tpu.memory_space<vmem>>, vector<16x32xf32>
    %c0_1 = arith.constant 0 : index
    %c0_2 = arith.constant 0 : index
    %c0_3 = arith.constant 0 : index
    %1 = vector.load %arg1[%c0_1, %c0_2, %c0_3] : memref<2x16x4xf32, #tpu.memory_space<vmem>>, vector<2x16x4xf32>
    %2 = vector.shape_cast %1 : vector<2x16x4xf32> to vector<32x4xf32>
    %3 = arith.truncf %2 : vector<32x4xf32> to vector<32x4xbf16>
    %c0_4 = arith.constant 0 : index
    %c0_5 = arith.constant 0 : index
    %4 = vector.load %arg2[%c0_4, %c0_5] : memref<4x96xbf16, #tpu.memory_space<vmem>>, vector<4x96xbf16>
    %cst = arith.constant dense<0.000000e+00> : vector<32x96xf32>
    %5 = tpu.matmul %3, %4, %cst {dimension_numbers = #tpu.dot_dimension_numbers<[1], [0], [0], [1], [0, 0, 1, 1], [], []>} : vector<32x4xbf16>, vector<4x96xbf16>, vector<32x96xf32> -> vector<32x96xf32>
    %6 = vector.extract_strided_slice %5 {offsets = [0, 0], sizes = [16, 96], strides = [1, 1]} : vector<32x96xf32> to vector<16x96xf32>
    %7 = vector.extract_strided_slice %6 {offsets = [0, 0], sizes = [16, 32], strides = [1, 1]} : vector<16x96xf32> to vector<16x32xf32>
    %8 = vector.extract_strided_slice %6 {offsets = [0, 32], sizes = [16, 32], strides = [1, 1]} : vector<16x96xf32> to vector<16x32xf32>
    %9 = vector.extract_strided_slice %6 {offsets = [0, 64], sizes = [16, 32], strides = [1, 1]} : vector<16x96xf32> to vector<16x32xf32>
    %c1_i32 = arith.constant 1 : i32
    %10 = tpu.dynamic_rotate %7 by %c1_i32 dim 0 : vector<16x32xf32>, i32 -> vector<16x32xf32>
    %11 = arith.addf %10, %8 : vector<16x32xf32>
    %c15_i32 = arith.constant 15 : i32
    %12 = tpu.dynamic_rotate %9 by %c15_i32 dim 0 : vector<16x32xf32>, i32 -> vector<16x32xf32>
    %13 = arith.addf %11, %12 : vector<16x32xf32>
    %14 = arith.addf %13, %0 : vector<16x32xf32>
    %c0_6 = arith.constant 0 : index
    %c0_7 = arith.constant 0 : index
    %c0_8 = arith.constant 0 : index
    %15 = vector.load %arg4[%c0_6, %c0_7, %c0_8] : memref<2x16x32xf32, #tpu.memory_space<vmem>>, vector<1x16x32xf32>
    %16 = vector.shape_cast %15 : vector<1x16x32xf32> to vector<16x32xf32>
    %17 = vector.shape_cast %14 : vector<16x32xf32> to vector<1x16x32xf32>
    tpu.vector_store %arg4[%c0_6, %c0_7, %c0_8], %17 {strides = array<i32>} : memref<2x16x32xf32, #tpu.memory_space<vmem>>, vector<1x16x32xf32>,
    %18 = tpu.iota {dimensions = array<i32: 0>} : vector<16x32xi32>
    %19 = vector.extract_strided_slice %18 {offsets = [0, 0], sizes = [16, 1], strides = [1, 1]} : vector<16x32xi32> to vector<16x1xi32>
    %20 = arith.mulf %14, %14 : vector<16x32xf32>
    %cst_9 = arith.constant dense<0.000000e+00> : vector<16xf32>
    %21 = vector.multi_reduction <add>, %20, %cst_9 [1] : vector<16x32xf32> to vector<16xf32>
    %22 = vector.shape_cast %21 : vector<16xf32> to vector<16x1xf32>
    %c1_i32_10 = arith.constant 1 : i32
    %23 = tpu.dynamic_rotate %14 by %c1_i32_10 dim 0 : vector<16x32xf32>, i32 -> vector<16x32xf32>
    %c1_i32_11 = arith.constant 1 : i32
    %24 = vector.broadcast %c1_i32_11 : i32 to vector<16x32xi32>
    %25 = arith.cmpi sge, %18, %24 : vector<16x32xi32>
    %cst_12 = arith.constant 0.000000e+00 : f32
    %26 = vector.broadcast %cst_12 : f32 to vector<16x32xf32>
    %27 = arith.select %25, %23, %26 : vector<16x32xi1>, vector<16x32xf32>
    %28 = arith.addf %14, %27 : vector<16x32xf32>
    %c1_i32_13 = arith.constant 1 : i32
    %29 = vector.broadcast %c1_i32_13 : i32 to vector<16x1xi32>
    %30 = arith.cmpi sge, %19, %29 : vector<16x1xi32>
    %31 = arith.mulf %23, %23 : vector<16x32xf32>
    %cst_14 = arith.constant dense<0.000000e+00> : vector<16xf32>
    %32 = vector.multi_reduction <add>, %31, %cst_14 [1] : vector<16x32xf32> to vector<16xf32>
    %33 = vector.shape_cast %32 : vector<16xf32> to vector<16x1xf32>
    %cst_15 = arith.constant 0.000000e+00 : f32
    %34 = vector.broadcast %cst_15 : f32 to vector<16x1xf32>
    %35 = arith.select %30, %33, %34 : vector<16x1xi1>, vector<16x1xf32>
    %36 = arith.addf %22, %35 : vector<16x1xf32>
    %c2_i32 = arith.constant 2 : i32
    %37 = tpu.dynamic_rotate %14 by %c2_i32 dim 0 : vector<16x32xf32>, i32 -> vector<16x32xf32>
    %c2_i32_16 = arith.constant 2 : i32
    %38 = vector.broadcast %c2_i32_16 : i32 to vector<16x32xi32>
    %39 = arith.cmpi sge, %18, %38 : vector<16x32xi32>
    %cst_17 = arith.constant 0.000000e+00 : f32
    %40 = vector.broadcast %cst_17 : f32 to vector<16x32xf32>
    %41 = arith.select %39, %37, %40 : vector<16x32xi1>, vector<16x32xf32>
    %42 = arith.addf %28, %41 : vector<16x32xf32>
    %c2_i32_18 = arith.constant 2 : i32
    %43 = vector.broadcast %c2_i32_18 : i32 to vector<16x1xi32>
    %44 = arith.cmpi sge, %19, %43 : vector<16x1xi32>
    %45 = arith.mulf %37, %37 : vector<16x32xf32>
    %cst_19 = arith.constant dense<0.000000e+00> : vector<16xf32>
    %46 = vector.multi_reduction <add>, %45, %cst_19 [1] : vector<16x32xf32> to vector<16xf32>
    %47 = vector.shape_cast %46 : vector<16xf32> to vector<16x1xf32>
    %cst_20 = arith.constant 0.000000e+00 : f32
    %48 = vector.broadcast %cst_20 : f32 to vector<16x1xf32>
    %49 = arith.select %44, %47, %48 : vector<16x1xi1>, vector<16x1xf32>
    %50 = arith.addf %36, %49 : vector<16x1xf32>
    %c3_i32 = arith.constant 3 : i32
    %51 = tpu.dynamic_rotate %14 by %c3_i32 dim 0 : vector<16x32xf32>, i32 -> vector<16x32xf32>
    %c3_i32_21 = arith.constant 3 : i32
    %52 = vector.broadcast %c3_i32_21 : i32 to vector<16x32xi32>
    %53 = arith.cmpi sge, %18, %52 : vector<16x32xi32>
    %cst_22 = arith.constant 0.000000e+00 : f32
    %54 = vector.broadcast %cst_22 : f32 to vector<16x32xf32>
    %55 = arith.select %53, %51, %54 : vector<16x32xi1>, vector<16x32xf32>
    %56 = arith.addf %42, %55 : vector<16x32xf32>
    %c3_i32_23 = arith.constant 3 : i32
    %57 = vector.broadcast %c3_i32_23 : i32 to vector<16x1xi32>
    %58 = arith.cmpi sge, %19, %57 : vector<16x1xi32>
    %59 = arith.mulf %51, %51 : vector<16x32xf32>
    %cst_24 = arith.constant dense<0.000000e+00> : vector<16xf32>
    %60 = vector.multi_reduction <add>, %59, %cst_24 [1] : vector<16x32xf32> to vector<16xf32>
    %61 = vector.shape_cast %60 : vector<16xf32> to vector<16x1xf32>
    %cst_25 = arith.constant 0.000000e+00 : f32
    %62 = vector.broadcast %cst_25 : f32 to vector<16x1xf32>
    %63 = arith.select %58, %61, %62 : vector<16x1xi1>, vector<16x1xf32>
    %64 = arith.addf %50, %63 : vector<16x1xf32>
    %65 = arith.sitofp %19 : vector<16x1xi32> to vector<16x1xf32>
    %cst_26 = arith.constant 1.000000e+00 : f32
    %66 = vector.broadcast %cst_26 : f32 to vector<16x1xf32>
    %67 = arith.addf %65, %66 : vector<16x1xf32>
    %cst_27 = arith.constant 4.000000e+00 : f32
    %68 = vector.broadcast %cst_27 : f32 to vector<16x1xf32>
    %69 = arith.minimumf %67, %68 : vector<16x1xf32>
    %70 = vector.broadcast %69 : vector<16x1xf32> to vector<16x32xf32>
    %71 = arith.divf %56, %70 : vector<16x32xf32>
    %cst_28 = arith.constant dense<0.000000e+00> : vector<16xf32>
    %72 = vector.multi_reduction <add>, %71, %cst_28 [1] : vector<16x32xf32> to vector<16xf32>
    %73 = vector.shape_cast %72 : vector<16xf32> to vector<16x1xf32>
    %74 = arith.divf %64, %69 : vector<16x1xf32>
    %75 = arith.mulf %71, %71 : vector<16x32xf32>
    %cst_29 = arith.constant dense<0.000000e+00> : vector<16xf32>
    %76 = vector.multi_reduction <add>, %75, %cst_29 [1] : vector<16x32xf32> to vector<16xf32>
    %77 = vector.shape_cast %76 : vector<16xf32> to vector<16x1xf32>
    %78 = arith.subf %74, %77 : vector<16x1xf32>
    %79 = arith.divf %78, %73 : vector<16x1xf32>
    %c0_30 = arith.constant 0 : index
    %c0_31 = arith.constant 0 : index
    %c0_32 = arith.constant 0 : index
    %80 = vector.load %arg5[%c0_30, %c0_31, %c0_32] : memref<2x16x1xf32, #tpu.memory_space<vmem>>, vector<1x16x1xf32>
    %81 = vector.shape_cast %80 : vector<1x16x1xf32> to vector<16x1xf32>
    %82 = vector.shape_cast %79 : vector<16x1xf32> to vector<1x16x1xf32>
    tpu.vector_store %arg5[%c0_30, %c0_31, %c0_32], %82 {strides = array<i32>} : memref<2x16x1xf32, #tpu.memory_space<vmem>>, vector<1x16x1xf32>,
    %83 = vector.extract_strided_slice %5 {offsets = [16, 0], sizes = [16, 96], strides = [1, 1]} : vector<32x96xf32> to vector<16x96xf32>
    %84 = vector.extract_strided_slice %83 {offsets = [0, 0], sizes = [16, 32], strides = [1, 1]} : vector<16x96xf32> to vector<16x32xf32>
    %85 = vector.extract_strided_slice %83 {offsets = [0, 32], sizes = [16, 32], strides = [1, 1]} : vector<16x96xf32> to vector<16x32xf32>
    %86 = vector.extract_strided_slice %83 {offsets = [0, 64], sizes = [16, 32], strides = [1, 1]} : vector<16x96xf32> to vector<16x32xf32>
    %c1_i32_33 = arith.constant 1 : i32
    %87 = tpu.dynamic_rotate %84 by %c1_i32_33 dim 0 : vector<16x32xf32>, i32 -> vector<16x32xf32>
    %88 = arith.addf %87, %85 : vector<16x32xf32>
    %c15_i32_34 = arith.constant 15 : i32
    %89 = tpu.dynamic_rotate %86 by %c15_i32_34 dim 0 : vector<16x32xf32>, i32 -> vector<16x32xf32>
    %90 = arith.addf %88, %89 : vector<16x32xf32>
    %91 = arith.addf %90, %0 : vector<16x32xf32>
    %c1 = arith.constant 1 : index
    %c0_35 = arith.constant 0 : index
    %c0_36 = arith.constant 0 : index
    %92 = vector.load %arg4[%c1, %c0_35, %c0_36] : memref<2x16x32xf32, #tpu.memory_space<vmem>>, vector<1x16x32xf32>
    %93 = vector.shape_cast %92 : vector<1x16x32xf32> to vector<16x32xf32>
    %94 = vector.shape_cast %91 : vector<16x32xf32> to vector<1x16x32xf32>
    tpu.vector_store %arg4[%c1, %c0_35, %c0_36], %94 {strides = array<i32>} : memref<2x16x32xf32, #tpu.memory_space<vmem>>, vector<1x16x32xf32>,
    %95 = tpu.iota {dimensions = array<i32: 0>} : vector<16x32xi32>
    %96 = vector.extract_strided_slice %95 {offsets = [0, 0], sizes = [16, 1], strides = [1, 1]} : vector<16x32xi32> to vector<16x1xi32>
    %97 = arith.mulf %91, %91 : vector<16x32xf32>
    %cst_37 = arith.constant dense<0.000000e+00> : vector<16xf32>
    %98 = vector.multi_reduction <add>, %97, %cst_37 [1] : vector<16x32xf32> to vector<16xf32>
    %99 = vector.shape_cast %98 : vector<16xf32> to vector<16x1xf32>
    %c1_i32_38 = arith.constant 1 : i32
    %100 = tpu.dynamic_rotate %91 by %c1_i32_38 dim 0 : vector<16x32xf32>, i32 -> vector<16x32xf32>
    %c1_i32_39 = arith.constant 1 : i32
    %101 = vector.broadcast %c1_i32_39 : i32 to vector<16x32xi32>
    %102 = arith.cmpi sge, %95, %101 : vector<16x32xi32>
    %cst_40 = arith.constant 0.000000e+00 : f32
    %103 = vector.broadcast %cst_40 : f32 to vector<16x32xf32>
    %104 = arith.select %102, %100, %103 : vector<16x32xi1>, vector<16x32xf32>
    %105 = arith.addf %91, %104 : vector<16x32xf32>
    %c1_i32_41 = arith.constant 1 : i32
    %106 = vector.broadcast %c1_i32_41 : i32 to vector<16x1xi32>
    %107 = arith.cmpi sge, %96, %106 : vector<16x1xi32>
    %108 = arith.mulf %100, %100 : vector<16x32xf32>
    %cst_42 = arith.constant dense<0.000000e+00> : vector<16xf32>
    %109 = vector.multi_reduction <add>, %108, %cst_42 [1] : vector<16x32xf32> to vector<16xf32>
    %110 = vector.shape_cast %109 : vector<16xf32> to vector<16x1xf32>
    %cst_43 = arith.constant 0.000000e+00 : f32
    %111 = vector.broadcast %cst_43 : f32 to vector<16x1xf32>
    %112 = arith.select %107, %110, %111 : vector<16x1xi1>, vector<16x1xf32>
    %113 = arith.addf %99, %112 : vector<16x1xf32>
    %c2_i32_44 = arith.constant 2 : i32
    %114 = tpu.dynamic_rotate %91 by %c2_i32_44 dim 0 : vector<16x32xf32>, i32 -> vector<16x32xf32>
    %c2_i32_45 = arith.constant 2 : i32
    %115 = vector.broadcast %c2_i32_45 : i32 to vector<16x32xi32>
    %116 = arith.cmpi sge, %95, %115 : vector<16x32xi32>
    %cst_46 = arith.constant 0.000000e+00 : f32
    %117 = vector.broadcast %cst_46 : f32 to vector<16x32xf32>
    %118 = arith.select %116, %114, %117 : vector<16x32xi1>, vector<16x32xf32>
    %119 = arith.addf %105, %118 : vector<16x32xf32>
    %c2_i32_47 = arith.constant 2 : i32
    %120 = vector.broadcast %c2_i32_47 : i32 to vector<16x1xi32>
    %121 = arith.cmpi sge, %96, %120 : vector<16x1xi32>
    %122 = arith.mulf %114, %114 : vector<16x32xf32>
    %cst_48 = arith.constant dense<0.000000e+00> : vector<16xf32>
    %123 = vector.multi_reduction <add>, %122, %cst_48 [1] : vector<16x32xf32> to vector<16xf32>
    %124 = vector.shape_cast %123 : vector<16xf32> to vector<16x1xf32>
    %cst_49 = arith.constant 0.000000e+00 : f32
    %125 = vector.broadcast %cst_49 : f32 to vector<16x1xf32>
    %126 = arith.select %121, %124, %125 : vector<16x1xi1>, vector<16x1xf32>
    %127 = arith.addf %113, %126 : vector<16x1xf32>
    %c3_i32_50 = arith.constant 3 : i32
    %128 = tpu.dynamic_rotate %91 by %c3_i32_50 dim 0 : vector<16x32xf32>, i32 -> vector<16x32xf32>
    %c3_i32_51 = arith.constant 3 : i32
    %129 = vector.broadcast %c3_i32_51 : i32 to vector<16x32xi32>
    %130 = arith.cmpi sge, %95, %129 : vector<16x32xi32>
    %cst_52 = arith.constant 0.000000e+00 : f32
    %131 = vector.broadcast %cst_52 : f32 to vector<16x32xf32>
    %132 = arith.select %130, %128, %131 : vector<16x32xi1>, vector<16x32xf32>
    %133 = arith.addf %119, %132 : vector<16x32xf32>
    %c3_i32_53 = arith.constant 3 : i32
    %134 = vector.broadcast %c3_i32_53 : i32 to vector<16x1xi32>
    %135 = arith.cmpi sge, %96, %134 : vector<16x1xi32>
    %136 = arith.mulf %128, %128 : vector<16x32xf32>
    %cst_54 = arith.constant dense<0.000000e+00> : vector<16xf32>
    %137 = vector.multi_reduction <add>, %136, %cst_54 [1] : vector<16x32xf32> to vector<16xf32>
    %138 = vector.shape_cast %137 : vector<16xf32> to vector<16x1xf32>
    %cst_55 = arith.constant 0.000000e+00 : f32
    %139 = vector.broadcast %cst_55 : f32 to vector<16x1xf32>
    %140 = arith.select %135, %138, %139 : vector<16x1xi1>, vector<16x1xf32>
    %141 = arith.addf %127, %140 : vector<16x1xf32>
    %142 = arith.sitofp %96 : vector<16x1xi32> to vector<16x1xf32>
    %cst_56 = arith.constant 1.000000e+00 : f32
    %143 = vector.broadcast %cst_56 : f32 to vector<16x1xf32>
    %144 = arith.addf %142, %143 : vector<16x1xf32>
    %cst_57 = arith.constant 4.000000e+00 : f32
    %145 = vector.broadcast %cst_57 : f32 to vector<16x1xf32>
    %146 = arith.minimumf %144, %145 : vector<16x1xf32>
    %147 = vector.broadcast %146 : vector<16x1xf32> to vector<16x32xf32>
    %148 = arith.divf %133, %147 : vector<16x32xf32>
    %cst_58 = arith.constant dense<0.000000e+00> : vector<16xf32>
    %149 = vector.multi_reduction <add>, %148, %cst_58 [1] : vector<16x32xf32> to vector<16xf32>
    %150 = vector.shape_cast %149 : vector<16xf32> to vector<16x1xf32>
    %151 = arith.divf %141, %146 : vector<16x1xf32>
    %152 = arith.mulf %148, %148 : vector<16x32xf32>
    %cst_59 = arith.constant dense<0.000000e+00> : vector<16xf32>
    %153 = vector.multi_reduction <add>, %152, %cst_59 [1] : vector<16x32xf32> to vector<16xf32>
    %154 = vector.shape_cast %153 : vector<16xf32> to vector<16x1xf32>
    %155 = arith.subf %151, %154 : vector<16x1xf32>
    %156 = arith.divf %155, %150 : vector<16x1xf32>
    %c1_60 = arith.constant 1 : index
    %c0_61 = arith.constant 0 : index
    %c0_62 = arith.constant 0 : index
    %157 = vector.load %arg5[%c1_60, %c0_61, %c0_62] : memref<2x16x1xf32, #tpu.memory_space<vmem>>, vector<1x16x1xf32>
    %158 = vector.shape_cast %157 : vector<1x16x1xf32> to vector<16x1xf32>
    %159 = vector.shape_cast %156 : vector<16x1xf32> to vector<1x16x1xf32>
    tpu.vector_store %arg5[%c1_60, %c0_61, %c0_62], %159 {strides = array<i32>} : memref<2x16x1xf32, #tpu.memory_space<vmem>>, vector<1x16x1xf32>,
    return
  }
  func.func @transform_0(%arg0: i32) -> (i32, i32, i32) {
    %c0_i32 = arith.constant 0 : i32
    %c0_i32_0 = arith.constant 0 : i32
    %c0_i32_1 = arith.constant 0 : i32
    %c0_i32_2 = arith.constant 0 : i32
    return %c0_i32, %c0_i32_0, %c0_i32_1 : i32, i32, i32
  }
  func.func @transform_1(%arg0: i32) -> (i32, i32) {
    %c0_i32 = arith.constant 0 : i32
    %c0_i32_0 = arith.constant 0 : i32
    %c0_i32_1 = arith.constant 0 : i32
    return %c0_i32, %c0_i32_0 : i32, i32
  }
  func.func @transform_2(%arg0: i32) -> (i32, i32) {
    %c0_i32 = arith.constant 0 : i32
    %c0_i32_0 = arith.constant 0 : i32
    %c0_i32_1 = arith.constant 0 : i32
    return %c0_i32, %c0_i32_0 : i32, i32
  }
  func.func @transform_3(%arg0: i32) -> (i32, i32, i32) {
    %c0_i32 = arith.constant 0 : i32
    %c0_i32_0 = arith.constant 0 : i32
    %c0_i32_1 = arith.constant 0 : i32
    %c0_i32_2 = arith.constant 0 : i32
    return %c0_i32, %c0_i32_0, %c0_i32_1 : i32, i32, i32
  }
  func.func @transform_4(%arg0: i32) -> (i32, i32, i32) {
    %c0_i32 = arith.constant 0 : i32
    %c0_i32_0 = arith.constant 0 : i32
    %c0_i32_1 = arith.constant 0 : i32
    %c0_i32_2 = arith.constant 0 : i32
    return %c0_i32, %c0_i32_0, %c0_i32_1 : i32, i32, i32
  }
}

</mosaic_0001>

<llo_original>
// kernel: tpu_custom_call.1
$region0: #{tpu_custom_call.1}
  #allocation0 [shape = 'u32[]', space=smem, size = 0x4, offset = 0x4, fixed_abs, tag = 'smem constant byte address 0x4 - core index']
  #allocation1 [shape = 'u32[72,128]{1,0:T(1,128)}', space=vmem, size = 0x9000, scoped, tag = 'internal scratch']
  %s0 = inlined_call_operand.vmem [shape: f32[2,16,4], index: 0, kind: input, shape index: {}]
  %s1 = inlined_call_operand.vmem [shape: bf16[4,96], index: 1, kind: input, shape index: {}]
  %s2 = inlined_call_operand.vmem [shape: f32[16,32], index: 2, kind: input, shape index: {}]
  %s3 = inlined_call_operand.hbm [shape: f32[2,16,32], index: 3, kind: output, shape index: {0}]
  %s4 = inlined_call_operand.vmem [shape: f32[2,16,1], index: 4, kind: output, shape index: {1}]
  %5 = xla_tuple %s3, %s4
  %s6 = sld [smem:[#allocation0]]
  $region30: #{tpu_custom_call.1} parent=0
    _
  %s8 = ssub.s32 1, %s6
  %s9 = scalar_select 0, %s8, %s6
  $region1: #{tpu_custom_call.1} parent=0
    #allocation2 [shape = 'u8[16384]{0}', space=vmem, size = 0x4000, scoped, tag = 'output window, operand 0, single buffered']
    #allocation3 [shape = 's32[1]{0}', space=sflag, size = 0x4, scoped, tag = 'scoped memory for tpu_custom_call.1']
    %10 = vsyncpa [#allocation3], 0
    // Predicated region
    $region2: #{tpu_custom_call.1} parent=1 // pred_check
      _
    $region3: #{tpu_custom_call.1} parent=1 // pred_check_branch
      %12 = sbr.rel (0) target = $region5
    $region4: #{tpu_custom_call.1} parent=1 // pred_region
      _
    $region5: #{tpu_custom_call.1} parent=1 // pred_fallthru
      _
    // Predicated region
    $region6: #{tpu_custom_call.1} parent=1 // pred_check
      _
    $region7: #{tpu_custom_call.1} parent=1 // pred_check_branch
      %14 = sbr.rel (0) target = $region9
    $region8: #{tpu_custom_call.1} parent=1 // pred_region
      _
    $region9: #{tpu_custom_call.1} parent=1 // pred_fallthru
      _
    // Predicated region
    $region10: #{tpu_custom_call.1} parent=1 // pred_check
      _
    $region11: #{tpu_custom_call.1} parent=1 // pred_check_branch
      %16 = sbr.rel (0) target = $region13
    $region12: #{tpu_custom_call.1} parent=1 // pred_region
      _
    $region13: #{tpu_custom_call.1} parent=1 // pred_fallthru
      _
    %v18 = vld [vmem:[%s2] sm:$0xff]
    %v19 = vld [vmem:[%s2 + $0x8] sm:$0xff]
    %v20 = vld [vmem:[%s0] sm:$0xff]
    %v21 = vld [vmem:[%s0 + $0x8] sm:$0xff]
    %v22 = vld [vmem:[%s0 + $0x10] sm:$0xff]
    %v23 = vld [vmem:[%s0 + $0x18] sm:$0xff]
    %v24 = vpack.c.bf16 %v21, %v20
    %v25 = vpack.c.bf16 %v23, %v22
    %v26 = vld [vmem:[%s1] sm:$0x3]
    %vm27 = vcmask 31744
    %v29 = vsel %vm27, %v24, 0
    %v32 = vsel %vm27, %v25, 0
    %vm34 = vcmask 1041408
    %v36 = vsel %vm34, %v26, 0
    %38 = vmatpush.bf16.msra.mxu0 0
    %39 = vmatpush.bf16.msra.mxu0 0
    %40 = vmatpush.bf16.msra.mxu0 0
    %41 = vmatpush.bf16.msra.mxu0 0
    %42 = vmatpush.bf16.msra.mxu0 0
    %43 = vmatpush.bf16.msra.mxu0 0
    %44 = vmatpush.bf16.msra.mxu0 0
    %45 = vmatpush.bf16.msra.mxu0 %v36
    %46 = vmatmul.bf16.gmra.mxu0 %v29
    %v47 = vpop.f32.mrf.mxu0
    %v48 = vadd.f32 0.0, %v47
    %v49 = vpop.f32.mrf.mxu0
    %v50 = vadd.f32 0.0, %v49
    %51 = vmatmul.bf16.gmra.mxu0 %v32
    %v52 = vpop.f32.mrf.mxu0
    %v53 = vadd.f32 0.0, %v52
    %v54 = vpop.f32.mrf.mxu0
    %v55 = vadd.f32 0.0, %v54
    %56 = vdwg.mxu0
    %v57 = vrot.slane %v48, 7
    %v58 = vrot.slane %v50, 7
    %v59 = vlaneseq
    %v60 = vshrl.u32 %v59, 7
    %vm61 = vcmp.lt.s32.totalorder %v60, 1
    %v62 = vsel %vm61, %v57, %v58
    %v63 = vsel %vm61, %v58, %v57
    %66 = vrot.lane.b32.xlu0 %v48, 96
    %v67 = vpop.permute.xlu0 %66
    %68 = vrot.lane.b32.xlu0 %v50, 96
    %v69 = vpop.permute.xlu0 %68
    %v72 = vadd.f32 %v63, %v67
    %v73 = vadd.f32 %v62, %v69
    %74 = vrot.lane.b32.xlu0 %v48, 64
    %v75 = vpop.permute.xlu0 %74
    %76 = vrot.lane.b32.xlu0 %v50, 64
    %v77 = vpop.permute.xlu0 %76
    %v80 = vrot.slane %v75, 1
    %v81 = vrot.slane %v77, 1
    %vm82 = vcmp.lt.s32.totalorder %v60, 7
    %v83 = vsel %vm82, %v80, %v81
    %v84 = vsel %vm82, %v81, %v80
    %v85 = vadd.f32 %v72, %v83
    %v86 = vadd.f32 %v73, %v84
    %v87 = vadd.f32 %v85, %v18
    %v88 = vadd.f32 %v86, %v19
    %vm89 = vcmask 261120
    %90 = vst.msk [vmem:[#allocation2] sm:$0xff] %vm89, %v87
    %91 = vst.msk [vmem:[#allocation2 + $0x8] sm:$0xff] %vm89, %v88
    %v92 = vadd.s32 %v60, 8
    %v93 = vmul.f32 %v87, %v87
    %v94 = vmul.f32 %v88, %v88
    %v95 = vsel %vm89, %v93, 0.0
    %96 = vadd.xlane.f32.xlu0 %v95
    %v97 = vpop.xlane.xlu0 %96
    %v98 = vsel %vm89, %v94, 0.0
    %99 = vadd.xlane.f32.xlu0 %v98
    %v100 = vpop.xlane.xlu0 %99
    %v101 = vrot.slane %v87, 7
    %v102 = vrot.slane %v88, 7
    %v103 = vsel %vm61, %v101, %v102
    %v104 = vsel %vm61, %v102, %v101
    %vm105 = vcmp.ge.s32.totalorder %v60, 1
    %vm106 = vcmp.ge.s32.totalorder %v92, 1
    %v107 = vsel %vm105, %v104, 0.0
    %v108 = vsel %vm106, %v103, 0.0
    %v109 = vadd.f32 %v87, %v107
    %v110 = vadd.f32 %v88, %v108
    %v111 = vmul.f32 %v104, %v104
    %v112 = vmul.f32 %v103, %v103
    %v113 = vsel %vm89, %v111, 0.0
    %114 = vadd.xlane.f32.xlu0 %v113
    %v115 = vpop.xlane.xlu0 %114
    %v116 = vsel %vm89, %v112, 0.0
    %117 = vadd.xlane.f32.xlu0 %v116
    %v118 = vpop.xlane.xlu0 %117
    %v119 = vsel %vm105, %v115, 0.0
    %v120 = vsel %vm106, %v118, 0.0
    %v121 = vadd.f32 %v97, %v119
    %v122 = vadd.f32 %v100, %v120
    %v123 = vrot.slane %v87, 6
    %v124 = vrot.slane %v88, 6
    %vm125 = vcmp.lt.s32.totalorder %v60, 2
    %v126 = vsel %vm125, %v123, %v124
    %v127 = vsel %vm125, %v124, %v123
    %vm128 = vcmp.ge.s32.totalorder %v60, 2
    %vm129 = vcmp.ge.s32.totalorder %v92, 2
    %v130 = vsel %vm128, %v127, 0.0
    %v131 = vsel %vm129, %v126, 0.0
    %v132 = vadd.f32 %v109, %v130
    %v133 = vadd.f32 %v110, %v131
    %v134 = vmul.f32 %v127, %v127
    %v135 = vmul.f32 %v126, %v126
    %v136 = vsel %vm89, %v134, 0.0
    %137 = vadd.xlane.f32.xlu0 %v136
    %v138 = vpop.xlane.xlu0 %137
    %v139 = vsel %vm89, %v135, 0.0
    %140 = vadd.xlane.f32.xlu0 %v139
    %v141 = vpop.xlane.xlu0 %140
    %v142 = vsel %vm128, %v138, 0.0
    %v143 = vsel %vm129, %v141, 0.0
    %v144 = vadd.f32 %v121, %v142
    %v145 = vadd.f32 %v122, %v143
    %v146 = vrot.slane %v87, 5
    %v147 = vrot.slane %v88, 5
    %vm148 = vcmp.lt.s32.totalorder %v60, 3
    %v149 = vsel %vm148, %v146, %v147
    %v150 = vsel %vm148, %v147, %v146
    %vm151 = vcmp.ge.s32.totalorder %v60, 3
    %vm152 = vcmp.ge.s32.totalorder %v92, 3
    %v153 = vsel %vm151, %v150, 0.0
    %v154 = vsel %vm152, %v149, 0.0
    %v155 = vadd.f32 %v132, %v153
    %v156 = vadd.f32 %v133, %v154
    %v157 = vmul.f32 %v150, %v150
    %v158 = vmul.f32 %v149, %v149
    %v159 = vsel %vm89, %v157, 0.0
    %160 = vadd.xlane.f32.xlu0 %v159
    %v161 = vpop.xlane.xlu0 %160
    %v162 = vsel %vm89, %v158, 0.0
    %163 = vadd.xlane.f32.xlu0 %v162
    %v164 = vpop.xlane.xlu0 %163
    %v165 = vsel %vm151, %v161, 0.0
    %v166 = vsel %vm152, %v164, 0.0
    %v167 = vadd.f32 %v144, %v165
    %v168 = vadd.f32 %v145, %v166
    %v169 = vcvt.s32.f32 %v60
    %v170 = vcvt.s32.f32 %v92
    %v171 = vadd.f32 %v169, 1.0
    %v172 = vadd.f32 %v170, 1.0
    %v173 = vmin.f32 %v171, 4.0
    %v174 = vmin.f32 %v172, 4.0
    %v175 = vrcp.pop %v173
    %v176 = vmul.f32 %v173, %v175
    %v177 = vsub.f32 1.0, %v176
    %v178 = vmul.f32 %v175, %v177
    %v179 = vadd.f32 %v175, %v178
    %vm180 = vweird.f32 %v173
    %vm181 = vweird.f32 %v175
    %vm182 = vmor %vm180, %vm181
    %v183 = vsel %vm182, %v175, %v179
    %v184 = vand.u32 2147483647, %v173
    %vm185 = vcmp.eq.f32.partialorder %v184, 8.507059e+37
    %v186 = vand.u32 %v173, 2147483648
    %v187 = vor.u32 1.1754944e-38, %v186
    %v188 = vsel %vm185, %v187, %v183
    %v189 = vmul.f32 %v155, %v188
    %v190 = vrcp.pop %v174
    %v191 = vmul.f32 %v174, %v190
    %v192 = vsub.f32 1.0, %v191
    %v193 = vmul.f32 %v190, %v192
    %v194 = vadd.f32 %v190, %v193
    %vm195 = vweird.f32 %v174
    %vm196 = vweird.f32 %v190
    %vm197 = vmor %vm195, %vm196
    %v198 = vsel %vm197, %v190, %v194
    %v199 = vand.u32 2147483647, %v174
    %vm200 = vcmp.eq.f32.partialorder %v199, 8.507059e+37
    %v201 = vand.u32 %v174, 2147483648
    %v202 = vor.u32 1.1754944e-38, %v201
    %v203 = vsel %vm200, %v202, %v198
    %v204 = vmul.f32 %v156, %v203
    %v205 = vsel %vm89, %v189, 0.0
    %206 = vadd.xlane.f32.xlu0 %v205
    %v207 = vpop.xlane.xlu0 %206
    %v208 = vsel %vm89, %v204, 0.0
    %209 = vadd.xlane.f32.xlu0 %v208
    %v210 = vpop.xlane.xlu0 %209
    %v211 = vmul.f32 %v167, %v188
    %v212 = vmul.f32 %v168, %v203
    %v213 = vmul.f32 %v189, %v189
    %v214 = vmul.f32 %v204, %v204
    %v215 = vsel %vm89, %v213, 0.0
    %216 = vadd.xlane.f32.xlu0 %v215
    %v217 = vpop.xlane.xlu0 %216
    %v218 = vsel %vm89, %v214, 0.0
    %219 = vadd.xlane.f32.xlu0 %v218
    %v220 = vpop.xlane.xlu0 %219
    %v221 = vsub.f32 %v211, %v217
    %v222 = vsub.f32 %v212, %v220
    %v223 = vrcp.pop %v207
    %v224 = vmul.f32 %v207, %v223
    %v225 = vsub.f32 1.0, %v224
    %v226 = vmul.f32 %v223, %v225
    %v227 = vadd.f32 %v223, %v226
    %vm228 = vweird.f32 %v207
    %vm229 = vweird.f32 %v223
    %vm230 = vmor %vm228, %vm229
    %v231 = vsel %vm230, %v223, %v227
    %v232 = vand.u32 2147483647, %v207
    %vm233 = vcmp.eq.f32.partialorder %v232, 8.507059e+37
    %v234 = vand.u32 %v207, 2147483648
    %v235 = vor.u32 1.1754944e-38, %v234
    %v236 = vsel %vm233, %v235, %v231
    %v237 = vmul.f32 %v221, %v236
    %v238 = vrcp.pop %v210
    %v239 = vmul.f32 %v210, %v238
    %v240 = vsub.f32 1.0, %v239
    %v241 = vmul.f32 %v238, %v240
    %v242 = vadd.f32 %v238, %v241
    %vm243 = vweird.f32 %v210
    %vm244 = vweird.f32 %v238
    %vm245 = vmor %vm243, %vm244
    %v246 = vsel %vm245, %v238, %v242
    %v247 = vand.u32 2147483647, %v210
    %vm248 = vcmp.eq.f32.partialorder %v247, 8.507059e+37
    %v249 = vand.u32 %v210, 2147483648
    %v250 = vor.u32 1.1754944e-38, %v249
    %v251 = vsel %vm248, %v250, %v246
    %v252 = vmul.f32 %v222, %v251
    %vm253 = vcmask 7168
    %254 = vst.msk [vmem:[%s4] sm:$0xff] %vm253, %v237
    %255 = vst.msk [vmem:[%s4 + $0x8] sm:$0xff] %vm253, %v252
    %v256 = vrot.slane %v53, 7
    %v257 = vrot.slane %v55, 7
    %v258 = vsel %vm61, %v256, %v257
    %v259 = vsel %vm61, %v257, %v256
    %262 = vrot.lane.b32.xlu0 %v53, 96
    %v263 = vpop.permute.xlu0 %262
    %264 = vrot.lane.b32.xlu0 %v55, 96
    %v265 = vpop.permute.xlu0 %264
    %v268 = vadd.f32 %v259, %v263
    %v269 = vadd.f32 %v258, %v265
    %270 = vrot.lane.b32.xlu0 %v53, 64
    %v271 = vpop.permute.xlu0 %270
    %272 = vrot.lane.b32.xlu0 %v55, 64
    %v273 = vpop.permute.xlu0 %272
    %v276 = vrot.slane %v271, 1
    %v277 = vrot.slane %v273, 1
    %v278 = vsel %vm82, %v276, %v277
    %v279 = vsel %vm82, %v277, %v276
    %v280 = vadd.f32 %v268, %v278
    %v281 = vadd.f32 %v269, %v279
    %v282 = vadd.f32 %v280, %v18
    %v283 = vadd.f32 %v281, %v19
    %s284 = scalar_lea.vmem [#allocation2], 16
    %285 = vst.msk [vmem:[%s284] sm:$0xff] %vm89, %v282
    %286 = vst.msk [vmem:[%s284 + $0x8] sm:$0xff] %vm89, %v283
    %v287 = vmul.f32 %v282, %v282
    %v288 = vmul.f32 %v283, %v283
    %v289 = vsel %vm89, %v287, 0.0
    %290 = vadd.xlane.f32.xlu0 %v289
    %v291 = vpop.xlane.xlu0 %290
    %v292 = vsel %vm89, %v288, 0.0
    %293 = vadd.xlane.f32.xlu0 %v292
    %v294 = vpop.xlane.xlu0 %293
    %v295 = vrot.slane %v282, 7
    %v296 = vrot.slane %v283, 7
    %v297 = vsel %vm61, %v295, %v296
    %v298 = vsel %vm61, %v296, %v295
    %v299 = vsel %vm105, %v298, 0.0
    %v300 = vsel %vm106, %v297, 0.0
    %v301 = vadd.f32 %v282, %v299
    %v302 = vadd.f32 %v283, %v300
    %v303 = vmul.f32 %v298, %v298
    %v304 = vmul.f32 %v297, %v297
    %v305 = vsel %vm89, %v303, 0.0
    %306 = vadd.xlane.f32.xlu0 %v305
    %v307 = vpop.xlane.xlu0 %306
    %v308 = vsel %vm89, %v304, 0.0
    %309 = vadd.xlane.f32.xlu0 %v308
    %v310 = vpop.xlane.xlu0 %309
    %v311 = vsel %vm105, %v307, 0.0
    %v312 = vsel %vm106, %v310, 0.0
    %v313 = vadd.f32 %v291, %v311
    %v314 = vadd.f32 %v294, %v312
    %v315 = vrot.slane %v282, 6
    %v316 = vrot.slane %v283, 6
    %v317 = vsel %vm125, %v315, %v316
    %v318 = vsel %vm125, %v316, %v315
    %v319 = vsel %vm128, %v318, 0.0
    %v320 = vsel %vm129, %v317, 0.0
    %v321 = vadd.f32 %v301, %v319
    %v322 = vadd.f32 %v302, %v320
    %v323 = vmul.f32 %v318, %v318
    %v324 = vmul.f32 %v317, %v317
    %v325 = vsel %vm89, %v323, 0.0
    %326 = vadd.xlane.f32.xlu0 %v325
    %v327 = vpop.xlane.xlu0 %326
    %v328 = vsel %vm89, %v324, 0.0
    %329 = vadd.xlane.f32.xlu0 %v328
    %v330 = vpop.xlane.xlu0 %329
    %v331 = vsel %vm128, %v327, 0.0
    %v332 = vsel %vm129, %v330, 0.0
    %v333 = vadd.f32 %v313, %v331
    %v334 = vadd.f32 %v314, %v332
    %v335 = vrot.slane %v282, 5
    %v336 = vrot.slane %v283, 5
    %v337 = vsel %vm148, %v335, %v336
    %v338 = vsel %vm148, %v336, %v335
    %v339 = vsel %vm151, %v338, 0.0
    %v340 = vsel %vm152, %v337, 0.0
    %v341 = vadd.f32 %v321, %v339
    %v342 = vadd.f32 %v322, %v340
    %v343 = vmul.f32 %v338, %v338
    %v344 = vmul.f32 %v337, %v337
    %v345 = vsel %vm89, %v343, 0.0
    %346 = vadd.xlane.f32.xlu0 %v345
    %v347 = vpop.xlane.xlu0 %346
    %v348 = vsel %vm89, %v344, 0.0
    %349 = vadd.xlane.f32.xlu0 %v348
    %v350 = vpop.xlane.xlu0 %349
    %v351 = vsel %vm151, %v347, 0.0
    %v352 = vsel %vm152, %v350, 0.0
    %v353 = vadd.f32 %v333, %v351
    %v354 = vadd.f32 %v334, %v352
    %v355 = vmul.f32 %v341, %v188
    %v356 = vmul.f32 %v342, %v203
    %v357 = vsel %vm89, %v355, 0.0
    %358 = vadd.xlane.f32.xlu0 %v357
    %v359 = vpop.xlane.xlu0 %358
    %v360 = vsel %vm89, %v356, 0.0
    %361 = vadd.xlane.f32.xlu0 %v360
    %v362 = vpop.xlane.xlu0 %361
    %v363 = vmul.f32 %v353, %v188
    %v364 = vmul.f32 %v354, %v203
    %v365 = vmul.f32 %v355, %v355
    %v366 = vmul.f32 %v356, %v356
    %v367 = vsel %vm89, %v365, 0.0
    %368 = vadd.xlane.f32.xlu0 %v367
    %v369 = vpop.xlane.xlu0 %368
    %v370 = vsel %vm89, %v366, 0.0
    %371 = vadd.xlane.f32.xlu0 %v370
    %v372 = vpop.xlane.xlu0 %371
    %v373 = vsub.f32 %v363, %v369
    %v374 = vsub.f32 %v364, %v372
    %v375 = vrcp.pop %v359
    %v376 = vmul.f32 %v359, %v375
    %v377 = vsub.f32 1.0, %v376
    %v378 = vmul.f32 %v375, %v377
    %v379 = vadd.f32 %v375, %v378
    %vm380 = vweird.f32 %v359
    %vm381 = vweird.f32 %v375
    %vm382 = vmor %vm380, %vm381
    %v383 = vsel %vm382, %v375, %v379
    %v384 = vand.u32 2147483647, %v359
    %vm385 = vcmp.eq.f32.partialorder %v384, 8.507059e+37
    %v386 = vand.u32 %v359, 2147483648
    %v387 = vor.u32 1.1754944e-38, %v386
    %v388 = vsel %vm385, %v387, %v383
    %v389 = vmul.f32 %v373, %v388
    %v390 = vrcp.pop %v362
    %v391 = vmul.f32 %v362, %v390
    %v392 = vsub.f32 1.0, %v391
    %v393 = vmul.f32 %v390, %v392
    %v394 = vadd.f32 %v390, %v393
    %vm395 = vweird.f32 %v362
    %vm396 = vweird.f32 %v390
    %vm397 = vmor %vm395, %vm396
    %v398 = vsel %vm397, %v390, %v394
    %v399 = vand.u32 2147483647, %v362
    %vm400 = vcmp.eq.f32.partialorder %v399, 8.507059e+37
    %v401 = vand.u32 %v362, 2147483648
    %v402 = vor.u32 1.1754944e-38, %v401
    %v403 = vsel %vm400, %v402, %v398
    %v404 = vmul.f32 %v374, %v403
    %s405 = scalar_lea.vmem %s4, 16
    %406 = vst.msk [vmem:[%s405] sm:$0xff] %vm253, %v389
    %407 = vst.msk [vmem:[%s405 + $0x8] sm:$0xff] %vm253, %v404
    // Predicated region
    $region14: #{tpu_custom_call.1} parent=1 // pred_check
      _
    $region15: #{tpu_custom_call.1} parent=1 // pred_check_branch
      %409 = sbr.rel (0) target = $region17
    $region16: #{tpu_custom_call.1} parent=1 // pred_region
      %411 = vsyncadd [#allocation3], 0
      %s412 = sshll.u32 [#allocation2], 4
      %s413 = int_to_ptr.vmem [resolvable:$true] %s412
      %s414 = sshll.u32 %s3, 4
      %s415 = int_to_ptr.hbm [resolvable:$true] %s414
      %420 = dma.vmem_to_hbm [thread:$0]  %s413, 512, %s415, [#allocation3], 128, 128, 8
    $region17: #{tpu_custom_call.1} parent=1 // pred_fallthru
      _
    // Predicated region
    $region18: #{tpu_custom_call.1} parent=1 // pred_check
      _
    $region19: #{tpu_custom_call.1} parent=1 // pred_check_branch
      %422 = sbr.rel (0) target = $region21
    $region20: #{tpu_custom_call.1} parent=1 // pred_region
      _
    $region21: #{tpu_custom_call.1} parent=1 // pred_fallthru
      _
    // Predicated region
    $region22: #{tpu_custom_call.1} parent=1 // pred_check
      _
    $region23: #{tpu_custom_call.1} parent=1 // pred_check_branch
      %424 = sbr.rel (0) target = $region25
    $region24: #{tpu_custom_call.1} parent=1 // pred_region
      %426 = dma.done [#allocation3], 512
    $region25: #{tpu_custom_call.1} parent=1 // pred_fallthru
      _
    // Predicated region
    $region26: #{tpu_custom_call.1} parent=1 // pred_check
      _
    $region27: #{tpu_custom_call.1} parent=1 // pred_check_branch
      %428 = sbr.rel (0) target = $region29
    $region28: #{tpu_custom_call.1} parent=1 // pred_region
      _
    $region29: #{tpu_custom_call.1} parent=1 // pred_fallthru
      _
    %429 = vsyncpa [#allocation3], 1

</llo_original>
